<compile_context>
chip_gen: v6e
topology: v6e:2x2x1
jax: 0.10.0
libtpu: 0.0.40
codegen_flags: <defaults>
</compile_context>

<pallas_src>
import functools

import jax
import jax.numpy as jnp
from jax import lax
from jax.experimental import pallas as pl
from jax.experimental.pallas import tpu as pltpu


def _evonorm_s0_kernel(x_ref, g_ref, b_ref, o_ref, *, eps, inv_count, inv_count_m1):
    """One block = `bn` samples of a single group.

    x_ref/o_ref: (bn, 1, R, L)   g_ref/b_ref: (1, R, 1)
    Implements: silu(x) * rsqrt(var_group(x, unbiased) + eps) * gamma + beta
    """
    x = x_ref[...]                                            # native dtype (bn, 1, R, L)
    xf = x.astype(jnp.float32)
    # Single-pass variance: f32 sum and sum-of-squares per (sample, group) row.
    s1 = jnp.sum(xf, axis=(-2, -1), keepdims=True)            # (bn, 1, 1, 1)
    s2 = jnp.sum(xf * xf, axis=(-2, -1), keepdims=True)
    mean = s1 * inv_count
    # torch.var default is unbiased (N-1 denominator); clamp guards rounding.
    var = jnp.maximum((s2 - s1 * mean) * inv_count_m1, 0.0)
    inv_std = lax.rsqrt(var + eps)                            # (bn, 1, 1, 1)

    g = g_ref[...].astype(jnp.float32)[None]                  # (1, 1, R, 1)
    b = b_ref[...].astype(jnp.float32)[None]
    scale = inv_std * g                                       # tiny (bn, 1, R, 1)

    num = x * jax.nn.sigmoid(x)                               # SiLU in native dtype
    o_ref[...] = (num * scale + b).astype(o_ref.dtype)


def _tpu_budgets():
    """Generation-aware (target_block_bytes, vmem_limit_bytes)."""
    try:
        info = pltpu.get_tpu_info()
        cap = getattr(info, "vmem_capacity_bytes", None)
        if cap is None:
            cap = getattr(info, "vmem_bytes", None)
        if cap is not None:
            if cap >= 96 * 1024 * 1024:                  # v5e / v6e: 128 MiB physical VMEM
                return 4 * 1024 * 1024, 64 * 1024 * 1024
            return 2 * 1024 * 1024, 48 * 1024 * 1024     # v7x: 64 MiB physical VMEM
    except Exception:
        pass
    return 2 * 1024 * 1024, 32 * 1024 * 1024             # conservative fallback


def evonorm_s0(x, gamma, beta, *, groups, eps=1e-5):
    """EvoNorm-S0 forward. x: (N, C, *spatial) channels-first. gamma/beta: (1, C, 1, ...)."""
    n, c = x.shape[0], x.shape[1]
    spatial = x.shape[2:]
    assert c % groups == 0, "channels must be divisible by groups"
    cg = c // groups
    sp = 1
    for s in spatial:
        sp *= s
    count = cg * sp                                      # elements per (sample, group)

    gamma_flat = gamma.reshape(c)
    beta_flat = beta.reshape(c)

    if sp % 128 == 0:
        # Lane/sublane-dense view of each group row (free, contiguous reshape).
        rows, lanes = count // 128, 128
        x4 = x.reshape(n, groups, rows, lanes)
        reps = sp // 128                                 # 128-lane rows per channel
        g3 = jnp.broadcast_to(gamma_flat.reshape(groups, cg, 1),
                              (groups, cg, reps)).reshape(groups, rows, 1)
        b3 = jnp.broadcast_to(beta_flat.reshape(groups, cg, 1),
                              (groups, cg, reps)).reshape(groups, rows, 1)
    else:
        # Fallback: per-channel row layout (channel affine stays per-sublane-row).
        rows, lanes = cg, sp
        x4 = x.reshape(n, groups, cg, sp)
        g3 = gamma_flat.reshape(groups, cg, 1)
        b3 = beta_flat.reshape(groups, cg, 1)

    # Block sizing: stream a generation-appropriate amount of x per grid step.
    itemsize = jnp.dtype(x.dtype).itemsize
    row_bytes = max(1, count * itemsize)
    target_block_bytes, vmem_limit = _tpu_budgets()
    bn = max(1, min(n, target_block_bytes // row_bytes))
    nb = pl.cdiv(n, bn)
    # Keep at least 2 grid steps so v7x's two TensorCores both get work.
    if nb * groups < 2 and n >= 2:
        bn = pl.cdiv(n, 2)
        nb = pl.cdiv(n, bn)
    # TODO(synk): when a single (rows, lanes) group row exceeds the VMEM budget
    # (very large 3-D volumes), add a third "arbitrary" grid axis over the row
    # with f32 sum / sum-of-squares accumulators in VMEM scratch and a finalize
    # step under pl.when, instead of forcing bn=1 giant blocks.

    x_spec = pl.BlockSpec((bn, 1, rows, lanes), lambda g, i: (i, g, 0, 0))
    gb_spec = pl.BlockSpec((1, rows, 1), lambda g, i: (g, 0, 0))

    inv_count = 1.0 / count
    # count == 1: torch's unbiased var would be NaN; we intentionally return
    # silu(x) * rsqrt(eps) * gamma + beta instead (documented divergence).
    inv_count_m1 = 1.0 / (count - 1) if count > 1 else 0.0

    out4 = pl.pallas_call(
        functools.partial(
            _evonorm_s0_kernel,
            eps=float(eps),
            inv_count=inv_count,
            inv_count_m1=inv_count_m1,
        ),
        out_shape=jax.ShapeDtypeStruct((n, groups, rows, lanes), x.dtype),
        grid_spec=pltpu.PrefetchScalarGridSpec(
            num_scalar_prefetch=0,
            # Batch axis innermost: gamma/beta block index is constant across
            # consecutive steps, so their DMAs are skipped after the first step
            # of each group.
            grid=(groups, nb),
            in_specs=[x_spec, gb_spec, gb_spec],
            out_specs=x_spec,
        ),
        compiler_params=pltpu.CompilerParams(
            dimension_semantics=("parallel", "parallel"),
            vmem_limit_bytes=vmem_limit,
        ),
    )(x4, g3, b3)
    return out4.reshape(x.shape)


def evonorm_s0_ref(x, gamma, beta, *, groups, eps=1e-5):
    """Pure-JAX reference mirroring the PyTorch module (S0, non_linear, affine)."""
    n, c = x.shape[0], x.shape[1]
    xg = x.reshape(n, groups, c // groups, *x.shape[2:])
    red_axes = tuple(range(2, xg.ndim))
    var = jnp.var(xg, axis=red_axes, keepdims=True, ddof=1)   # unbiased, like torch.var
    std = jnp.broadcast_to(jnp.sqrt(var + eps), xg.shape).reshape(x.shape)
    num = x * jax.nn.sigmoid(x)                               # SiLU
    return num / std * gamma + beta


if __name__ == "__main__":
    key = jax.random.PRNGKey(0)
    keys = jax.random.split(key, 2)

    def run_case(n, c, spatial, groups, k):
        shape = (n, c) + spatial
        # Nonzero mean exercises the single-pass variance path.
        x = jax.random.normal(k, shape, dtype=jnp.float32) + 0.5
        pshape = (1, c) + (1,) * len(spatial)
        gamma = (1.0 + 0.05 * jnp.arange(c, dtype=jnp.float32)).reshape(pshape)
        beta = (0.01 * jnp.arange(c, dtype=jnp.float32)).reshape(pshape)
        out = jax.block_until_ready(evonorm_s0(x, gamma, beta, groups=groups))
        ref = evonorm_s0_ref(x, gamma, beta, groups=groups)
        if not bool(jnp.allclose(out, ref, atol=1e-4, rtol=1e-4)):
            raise AssertionError(f"Pallas EvoNorm-S0 mismatch for shape {shape}, groups={groups}")

    # Module config: EvoNorm(input=16, version='S0', non_linear=True, affine=True,
    #                        groups=4, eps=1e-5, dim=2)  -> 4D NCHW input.
    run_case(2, 16, (16, 16), 4, keys[0])   # sp=256 -> lane-dense (rows,128) layout
    run_case(3, 8, (7, 7), 2, keys[1])      # sp=49  -> (cg, sp) fallback layout, odd batch

    print("KERNEL_OK")
</pallas_src>

<mosaic_0001>
module attributes {stable_mosaic.version = 11 : i64} {
  func.func @_evonorm_s0_kernel(%arg0: i32, %arg1: i32, %arg2: memref<2x1x8x128xf32, #tpu.memory_space<vmem>>, %arg3: memref<1x8x1xf32, #tpu.memory_space<vmem>>, %arg4: memref<1x8x1xf32, #tpu.memory_space<vmem>>, %arg5: memref<2x1x8x128xf32, #tpu.memory_space<vmem>>) attributes {dimension_semantics = [#tpu.dimension_semantics<parallel>, #tpu.dimension_semantics<parallel>], iteration_bounds = array<i64: 4, 1>, scalar_prefetch = 0 : i64, scratch_operands = 0 : i64, tpu.core_type = #tpu.core_type<tc>, window_params = [{transform_indices = @transform_0, window_bounds = array<i64: 2, 1, 8, 128>}, {transform_indices = @transform_1, window_bounds = array<i64: 1, 8, 1>}, {transform_indices = @transform_2, window_bounds = array<i64: 1, 8, 1>}, {transform_indices = @transform_3, window_bounds = array<i64: 2, 1, 8, 128>}]} {
    %c0 = arith.constant 0 : index
    %c0_0 = arith.constant 0 : index
    %c0_1 = arith.constant 0 : index
    %c0_2 = arith.constant 0 : index
    %0 = vector.load %arg2[%c0, %c0_0, %c0_1, %c0_2] : memref<2x1x8x128xf32, #tpu.memory_space<vmem>>, vector<2x1x8x128xf32>
    %cst = arith.constant dense<0.000000e+00> : vector<2x1xf32>
    %1 = vector.multi_reduction <add>, %0, %cst [2, 3] : vector<2x1x8x128xf32> to vector<2x1xf32>
    %2 = vector.shape_cast %1 : vector<2x1xf32> to vector<2x1x1x1xf32>
    %3 = arith.mulf %0, %0 : vector<2x1x8x128xf32>
    %cst_3 = arith.constant dense<0.000000e+00> : vector<2x1xf32>
    %4 = vector.multi_reduction <add>, %3, %cst_3 [2, 3] : vector<2x1x8x128xf32> to vector<2x1xf32>
    %5 = vector.shape_cast %4 : vector<2x1xf32> to vector<2x1x1x1xf32>
    %cst_4 = arith.constant 9.765625E-4 : f32
    %6 = vector.broadcast %cst_4 : f32 to vector<2x1x1x1xf32>
    %7 = arith.mulf %2, %6 : vector<2x1x1x1xf32>
    %8 = arith.mulf %2, %7 : vector<2x1x1x1xf32>
    %9 = arith.subf %5, %8 : vector<2x1x1x1xf32>
    %cst_5 = arith.constant 9.77517105E-4 : f32
    %10 = vector.broadcast %cst_5 : f32 to vector<2x1x1x1xf32>
    %11 = arith.mulf %9, %10 : vector<2x1x1x1xf32>
    %cst_6 = arith.constant 0.000000e+00 : f32
    %12 = vector.broadcast %cst_6 : f32 to vector<2x1x1x1xf32>
    %13 = arith.maximumf %11, %12 : vector<2x1x1x1xf32>
    %cst_7 = arith.constant 9.99999974E-6 : f32
    %14 = vector.broadcast %cst_7 : f32 to vector<2x1x1x1xf32>
    %15 = arith.addf %13, %14 : vector<2x1x1x1xf32>
    %16 = math.rsqrt %15 : vector<2x1x1x1xf32>
    %c0_8 = arith.constant 0 : index
    %c0_9 = arith.constant 0 : index
    %c0_10 = arith.constant 0 : index
    %17 = vector.load %arg3[%c0_8, %c0_9, %c0_10] : memref<1x8x1xf32, #tpu.memory_space<vmem>>, vector<1x8x1xf32>
    %18 = vector.shape_cast %17 : vector<1x8x1xf32> to vector<1x1x8x1xf32>
    %c0_11 = arith.constant 0 : index
    %c0_12 = arith.constant 0 : index
    %c0_13 = arith.constant 0 : index
    %19 = vector.load %arg4[%c0_11, %c0_12, %c0_13] : memref<1x8x1xf32, #tpu.memory_space<vmem>>, vector<1x8x1xf32>
    %20 = vector.shape_cast %19 : vector<1x8x1xf32> to vector<1x1x8x1xf32>
    %21 = vector.broadcast %16 : vector<2x1x1x1xf32> to vector<2x1x8x1xf32>
    %22 = vector.broadcast %18 : vector<1x1x8x1xf32> to vector<2x1x8x1xf32>
    %23 = arith.mulf %21, %22 : vector<2x1x8x1xf32>
    %24 = arith.negf %0 : vector<2x1x8x128xf32>
    %25 = math.exp %24 : vector<2x1x8x128xf32>
    %cst_14 = arith.constant 1.000000e+00 : f32
    %26 = vector.broadcast %cst_14 : f32 to vector<2x1x8x128xf32>
    %27 = arith.addf %26, %25 : vector<2x1x8x128xf32>
    %28 = arith.divf %26, %27 : vector<2x1x8x128xf32>
    %29 = arith.mulf %0, %28 : vector<2x1x8x128xf32>
    %30 = vector.broadcast %23 : vector<2x1x8x1xf32> to vector<2x1x8x128xf32>
    %31 = arith.mulf %29, %30 : vector<2x1x8x128xf32>
    %32 = vector.broadcast %20 : vector<1x1x8x1xf32> to vector<2x1x8x128xf32>
    %33 = arith.addf %31, %32 : vector<2x1x8x128xf32>
    %c0_15 = arith.constant 0 : index
    %c0_16 = arith.constant 0 : index
    %c0_17 = arith.constant 0 : index
    %c0_18 = arith.constant 0 : index
    %34 = vector.load %arg5[%c0_15, %c0_16, %c0_17, %c0_18] : memref<2x1x8x128xf32, #tpu.memory_space<vmem>>, vector<2x1x8x128xf32>
    tpu.vector_store %arg5[%c0_15, %c0_16, %c0_17, %c0_18], %33 {strides = array<i32>} : memref<2x1x8x128xf32, #tpu.memory_space<vmem>>, vector<2x1x8x128xf32>,
    return
  }
  func.func @transform_0(%arg0: i32, %arg1: i32) -> (i32, i32, i32, i32) {
    %c0_i32 = arith.constant 0 : i32
    %c0_i32_0 = arith.constant 0 : i32
    %c0_i32_1 = arith.constant 0 : i32
    return %arg1, %arg0, %c0_i32, %c0_i32_0 : i32, i32, i32, i32
  }
  func.func @transform_1(%arg0: i32, %arg1: i32) -> (i32, i32, i32) {
    %c0_i32 = arith.constant 0 : i32
    %c0_i32_0 = arith.constant 0 : i32
    %c0_i32_1 = arith.constant 0 : i32
    return %arg0, %c0_i32, %c0_i32_0 : i32, i32, i32
  }
  func.func @transform_2(%arg0: i32, %arg1: i32) -> (i32, i32, i32) {
    %c0_i32 = arith.constant 0 : i32
    %c0_i32_0 = arith.constant 0 : i32
    %c0_i32_1 = arith.constant 0 : i32
    return %arg0, %c0_i32, %c0_i32_0 : i32, i32, i32
  }
  func.func @transform_3(%arg0: i32, %arg1: i32) -> (i32, i32, i32, i32) {
    %c0_i32 = arith.constant 0 : i32
    %c0_i32_0 = arith.constant 0 : i32
    %c0_i32_1 = arith.constant 0 : i32
    return %arg1, %arg0, %c0_i32, %c0_i32_0 : i32, i32, i32, i32
  }
}

</mosaic_0001>

<llo_original>
// kernel: tpu_custom_call.1
$region0: #{tpu_custom_call.1}
  #allocation0 [shape = 'u32[]', space=smem, size = 0x4, offset = 0x4, fixed_abs, tag = 'smem constant byte address 0x4 - core index']
  #allocation1 [shape = 'u32[144,128]{1,0:T(1,128)}', space=vmem, size = 0x12000, scoped, tag = 'internal scratch']
  %s0 = inlined_call_operand.vmem [shape: f32[2,4,8,128], index: 0, kind: input, shape index: {}]
  %s1 = inlined_call_operand.vmem [shape: f32[4,8,1], index: 1, kind: input, shape index: {}]
  %s2 = inlined_call_operand.vmem [shape: f32[4,8,1], index: 2, kind: input, shape index: {}]
  %s3 = inlined_call_operand.hbm [shape: f32[2,4,8,128], index: 3, kind: output, shape index: {}]
  %s4 = sld [smem:[#allocation0]]
  $region83: #{tpu_custom_call.1} parent=0
    _
  %s6 = ssub.s32 1, %s4
  %s7 = scalar_select 0, %s6, %s4
  $region1: #{tpu_custom_call.1} parent=0
    #allocation2 [shape = 'u8[16384]{0}', space=vmem, size = 0x4000, scoped, tag = 'input window, operand 0']
    #allocation3 [shape = 'u8[16384]{0}', space=vmem, size = 0x4000, scoped, tag = 'output window, operand 0']
    #allocation4 [shape = 's32[2]{0}', space=sflag, size = 0x8, scoped, tag = 'scoped memory for tpu_custom_call.1']
    %8 = vsyncpa [#allocation4], 0
    %s9 = scalar_lea.sflag [#allocation4], 1
    %10 = vsyncpa %s9, 0
    loop: start=0, step=1, limit=6
    $region2: #{tpu_custom_call.1} parent=1 // loop_pre_header
      _
    $region3: #{tpu_custom_call.1} parent=1 // loop_header
      %s12 = sphi 0, %s16
      %p13 = scmp.ge.s32.totalorder %s12, 6
      %s19 = sphi 0, %s31
      %s20 = sphi 0, %s27
      %s21 = sphi 0, %s19
      %s22 = sphi 0, %s20
      %s23 = sphi 0, %s21
      %s24 = sphi 0, %s22
      %s36 = sphi 0, %s38
      %s39 = sphi 0, %s36
      %s40 = sphi 0, %s39
      %s56 = sphi 0, %s40
      %s62 = sphi 0, %s64
      %s65 = sphi 0, %s62
      %s66 = sphi 0, %s65
      %s82 = sphi 0, %s66
      %s88 = sphi 0, %s90
      %s91 = sphi 0, %s88
      %s92 = sphi 0, %s91
      %s108 = sphi 0, %s92
      %s116 = sphi 0, %s118
      %s119 = sphi 0, %s116
      %s120 = sphi 0, %s119
      %s136 = sphi 0, %s120
    $region4: #{tpu_custom_call.1} parent=1 // loop_header_branch
      %15 = sbr.rel (%p13) target = $region8
    $region5: #{tpu_custom_call.1} parent=1 // loop_body
      %s17 = ssub.s32 %s12, 1
      %s18 = ssub.s32 %s12, 2
      %s25 = sadd.s32 1, %s20
      %p26 = scmp.ge.s32.totalorder %s25, 1
      %s27 = scalar_select %p26, 0, %s25
      %s28 = sadd.s32 1, %s19
      %s29 = scalar_select %p26, %s28, %s19
      %p30 = scmp.ge.s32.totalorder %s29, 4
      %s31 = scalar_select %p30, 0, %s29
      %s32 = ssub.s32 %s20, %s27
      %s33 = ssub.s32 %s19, %s31
      %s34 = sor.u32 %s32, %s33
      %p35 = scmp.eq.s32.totalorder %s34, 0
      %s37 = sadd.s32 %s36, 1
      %s38 = scalar_select %p35, %s36, %s37
      %p41 = pneg %p35
      %p42 = scmp.eq.s32.totalorder %s12, 3
      %p43 = por %p41, %p42
      %p44 = scmp.ne.s32.totalorder %s36, %s39
      %p45 = scmp.eq.s32.totalorder %s12, 0
      %p46 = por %p44, %p45
      %p47 = scmp.ne.s32.totalorder %s36, %s39
      %p48 = scmp.eq.s32.totalorder %s17, 3
      %p49 = por %p47, %p48
      %p50 = scmp.ne.s32.totalorder %s39, %s40
      %p51 = scmp.eq.s32.totalorder %s17, 0
      %p52 = por %p50, %p51
      %p53 = scmp.ne.s32.totalorder %s39, %s40
      %p54 = scmp.eq.s32.totalorder %s18, 3
      %p55 = por %p53, %p54
      %p57 = scmp.ne.s32.totalorder %s40, %s56
      %p58 = scmp.eq.s32.totalorder %s18, 0
      %p59 = por %p57, %p58
      %s60 = ssub.s32 %s19, %s31
      %p61 = scmp.eq.s32.totalorder %s60, 0
      %s63 = sadd.s32 %s62, 1
      %s64 = scalar_select %p61, %s62, %s63
      %p67 = pneg %p61
      %p68 = scmp.eq.s32.totalorder %s12, 3
      %p69 = por %p67, %p68
      %p70 = scmp.ne.s32.totalorder %s62, %s65
      %p71 = scmp.eq.s32.totalorder %s12, 0
      %p72 = por %p70, %p71
      %p73 = scmp.ne.s32.totalorder %s62, %s65
      %p74 = scmp.eq.s32.totalorder %s17, 3
      %p75 = por %p73, %p74
      %p76 = scmp.ne.s32.totalorder %s65, %s66
      %p77 = scmp.eq.s32.totalorder %s17, 0
      %p78 = por %p76, %p77
      %p79 = scmp.ne.s32.totalorder %s65, %s66
      %p80 = scmp.eq.s32.totalorder %s18, 3
      %p81 = por %p79, %p80
      %p83 = scmp.ne.s32.totalorder %s66, %s82
      %p84 = scmp.eq.s32.totalorder %s18, 0
      %p85 = por %p83, %p84
      %s86 = ssub.s32 %s19, %s31
      %p87 = scmp.eq.s32.totalorder %s86, 0
      %s89 = sadd.s32 %s88, 1
      %s90 = scalar_select %p87, %s88, %s89
      %p93 = pneg %p87
      %p94 = scmp.eq.s32.totalorder %s12, 3
      %p95 = por %p93, %p94
      %p96 = scmp.ne.s32.totalorder %s88, %s91
      %p97 = scmp.eq.s32.totalorder %s12, 0
      %p98 = por %p96, %p97
      %p99 = scmp.ne.s32.totalorder %s88, %s91
      %p100 = scmp.eq.s32.totalorder %s17, 3
      %p101 = por %p99, %p100
      %p102 = scmp.ne.s32.totalorder %s91, %s92
      %p103 = scmp.eq.s32.totalorder %s17, 0
      %p104 = por %p102, %p103
      %p105 = scmp.ne.s32.totalorder %s91, %s92
      %p106 = scmp.eq.s32.totalorder %s18, 3
      %p107 = por %p105, %p106
      %p109 = scmp.ne.s32.totalorder %s92, %s108
      %p110 = scmp.eq.s32.totalorder %s18, 0
      %p111 = por %p109, %p110
      %s112 = ssub.s32 %s20, %s27
      %s113 = ssub.s32 %s19, %s31
      %s114 = sor.u32 %s112, %s113
      %p115 = scmp.eq.s32.totalorder %s114, 0
      %s117 = sadd.s32 %s116, 1
      %s118 = scalar_select %p115, %s116, %s117
      %p121 = pneg %p115
      %p122 = scmp.eq.s32.totalorder %s12, 3
      %p123 = por %p121, %p122
      %p124 = scmp.ne.s32.totalorder %s116, %s119
      %p125 = scmp.eq.s32.totalorder %s12, 0
      %p126 = por %p124, %p125
      %p127 = scmp.ne.s32.totalorder %s116, %s119
      %p128 = scmp.eq.s32.totalorder %s17, 3
      %p129 = por %p127, %p128
      %p130 = scmp.ne.s32.totalorder %s119, %s120
      %p131 = scmp.eq.s32.totalorder %s17, 0
      %p132 = por %p130, %p131
      %p133 = scmp.ne.s32.totalorder %s119, %s120
      %p134 = scmp.eq.s32.totalorder %s18, 3
      %p135 = por %p133, %p134
      %p137 = scmp.ne.s32.totalorder %s120, %s136
      %p138 = scmp.eq.s32.totalorder %s18, 0
      %p139 = por %p137, %p138
      %p140 = scmp.le.s32.totalorder 1, %s12
      %p141 = scmp.lt.s32.totalorder %s12, 5
      %p142 = pnand %p140, %p141
      %p143 = pneg %p142
      // Predicated region
      $region9: #{tpu_custom_call.1} parent=5 // pred_check
        _
      $region10: #{tpu_custom_call.1} parent=5 // pred_check_branch
        %145 = sbr.rel (%p142) target = $region12
      $region11: #{tpu_custom_call.1} parent=5 // pred_region
        %s146 = ssub.s32 %s12, 1
      $region12: #{tpu_custom_call.1} parent=5 // pred_fallthru
        _
      %p147 = scmp.lt.s32.totalorder %s12, 4
      // Predicated region
      $region13: #{tpu_custom_call.1} parent=5 // pred_check
        %p148 = pneg %p147
      $region14: #{tpu_custom_call.1} parent=5 // pred_check_branch
        %150 = sbr.rel (%p148) target = $region16
      $region15: #{tpu_custom_call.1} parent=5 // pred_region
        // Predicated region
        $region17: #{tpu_custom_call.1} parent=15 // pred_check
          %p151 = pneg %p46
        $region18: #{tpu_custom_call.1} parent=15 // pred_check_branch
          %153 = sbr.rel (%p151) target = $region20
        $region19: #{tpu_custom_call.1} parent=15 // pred_region
          %s154 = sand.u32 %s36, 1
          %s155 = sand.u32 %s36, 1
          %s156 = smul.addr %s155, 16
          %s157 = scalar_lea.vmem [#allocation2], %s156
          %s158 = smul.u32 2, %s20
          %s159 = smul.addr %s158, 4
          %s160 = sadd.s32 %s19, %s159
          %s161 = smul.addr %s160, 8
          %s162 = scalar_lea.vmem %s0, %s161
          // Predicated region
          $region21: #{tpu_custom_call.1} parent=19 // pred_check
            _
          $region22: #{tpu_custom_call.1} parent=19 // pred_check_branch
            %164 = sbr.rel (0) target = $region24
          $region23: #{tpu_custom_call.1} parent=19 // pred_region
            // Predicated region
            $region25: #{tpu_custom_call.1} parent=23 // pred_check
              _
            $region26: #{tpu_custom_call.1} parent=23 // pred_check_branch
              %166 = sbr.rel (0) target = $region28
            $region27: #{tpu_custom_call.1} parent=23 // pred_region
              // Predicated region
              $region40: #{tpu_custom_call.1} parent=27 // pred_check
                _
              $region41: #{tpu_custom_call.1} parent=27 // pred_check_branch
                %184 = sbr.rel (0) target = $region43
              $region42: #{tpu_custom_call.1} parent=27 // pred_region
                loop: start=0, step=1, limit=1
                $region44: #{tpu_custom_call.1} parent=42 // loop_pre_header
                  _
                $region45: #{tpu_custom_call.1} parent=42 // loop_header
                  %s186 = sphi 0, %s190
                  %p187 = scmp.ge.s32.totalorder %s186, 1
                  %s191 = sphi %s162, %s162
                  %s192 = sphi %s157, %s157
                $region46: #{tpu_custom_call.1} parent=42 // loop_header_branch
                  %189 = sbr.rel (%p187) target = $region50
                $region47: #{tpu_custom_call.1} parent=42 // loop_body
                  %v193 = vld [vmem:[%s191] sm:$0xff]
                  %194 = vst [vmem:[%s192] sm:$0xff] %v193
                  %v195 = vld [vmem:[%s191 + $0x20] sm:$0xff]
                  %196 = vst [vmem:[%s192 + $0x8] sm:$0xff] %v195
                $region48: #{tpu_custom_call.1} parent=42 // loop_footer
                  %s190 = sadd.s32 1, %s186
                $region49: #{tpu_custom_call.1} parent=42 // loop_footer_branch
                  %185 = sbr.rel target = $region45
                $region50: #{tpu_custom_call.1} parent=42 // loop_exit
                  _
              $region43: #{tpu_custom_call.1} parent=27 // pred_fallthru
                _
              // Predicated region
              $region51: #{tpu_custom_call.1} parent=27 // pred_check
                _
              $region52: #{tpu_custom_call.1} parent=27 // pred_check_branch
                %198 = sbr.rel target = $region54
              $region53: #{tpu_custom_call.1} parent=27 // pred_region
                _
              $region54: #{tpu_custom_call.1} parent=27 // pred_fallthru
                _
            $region28: #{tpu_custom_call.1} parent=23 // pred_fallthru
              _
            // Predicated region
            $region29: #{tpu_custom_call.1} parent=23 // pred_check
              _
            $region30: #{tpu_custom_call.1} parent=23 // pred_check_branch
              %168 = sbr.rel target = $region32
            $region31: #{tpu_custom_call.1} parent=23 // pred_region
              %s170 = ssub.s32 256, 1
              loop: start=0, step=1, limit=1
              $region33: #{tpu_custom_call.1} parent=31 // loop_pre_header
                _
              $region34: #{tpu_custom_call.1} parent=31 // loop_header
                %s172 = sphi 0, %s176
                %p173 = scmp.ge.s32.totalorder %s172, 1
                %s177 = sphi %s162, %s162
                %s178 = sphi %s157, %s157
              $region35: #{tpu_custom_call.1} parent=31 // loop_header_branch
                %175 = sbr.rel (%p173) target = $region39
              $region36: #{tpu_custom_call.1} parent=31 // loop_body
                %v179 = vld [vmem:[%s177] sm:%s170]
                %180 = vst [vmem:[%s178] sm:%s170] %v179
                %v181 = vld [vmem:[%s177 + $0x20] sm:%s170]
                %182 = vst [vmem:[%s178 + $0x8] sm:%s170] %v181
              $region37: #{tpu_custom_call.1} parent=31 // loop_footer
                %s176 = sadd.s32 1, %s172
              $region38: #{tpu_custom_call.1} parent=31 // loop_footer_branch
                %171 = sbr.rel target = $region34
              $region39: #{tpu_custom_call.1} parent=31 // loop_exit
                _
            $region32: #{tpu_custom_call.1} parent=23 // pred_fallthru
              _
          $region24: #{tpu_custom_call.1} parent=19 // pred_fallthru
            _
          %199 = vnop
        $region20: #{tpu_custom_call.1} parent=15 // pred_fallthru
          _
        // Predicated region
        $region55: #{tpu_custom_call.1} parent=15 // pred_check
          %p200 = pneg %p72
        $region56: #{tpu_custom_call.1} parent=15 // pred_check_branch
          %202 = sbr.rel (%p200) target = $region58
        $region57: #{tpu_custom_call.1} parent=15 // pred_region
          %p203 = scmp.lt.s32.totalorder %s19, 3
          %s204 = scalar_select %p203, %s19, 3
          %s205 = smul.addr %s204, 8
          %s206 = scalar_lea.vmem %s1, %s205
        $region58: #{tpu_custom_call.1} parent=15 // pred_fallthru
          _
        // Predicated region
        $region59: #{tpu_custom_call.1} parent=15 // pred_check
          %p207 = pneg %p98
        $region60: #{tpu_custom_call.1} parent=15 // pred_check_branch
          %209 = sbr.rel (%p207) target = $region62
        $region61: #{tpu_custom_call.1} parent=15 // pred_region
          %p210 = scmp.lt.s32.totalorder %s19, 3
          %s211 = scalar_select %p210, %s19, 3
          %s212 = smul.addr %s211, 8
          %s213 = scalar_lea.vmem %s2, %s212
        $region62: #{tpu_custom_call.1} parent=15 // pred_fallthru
          _
      $region16: #{tpu_custom_call.1} parent=5 // pred_fallthru
        _
      %p214 = scmp.le.s32.totalorder 1, %s12
      %p215 = scmp.lt.s32.totalorder %s12, 5
      %p216 = pnand %p214, %p215
      %p217 = pneg %p216
      // Predicated region
      $region63: #{tpu_custom_call.1} parent=5 // pred_check
        _
      $region64: #{tpu_custom_call.1} parent=5 // pred_check_branch
        %219 = sbr.rel (%p216) target = $region66
      $region65: #{tpu_custom_call.1} parent=5 // pred_region
        %s220 = ssub.s32 %s12, 1
        %s221 = sand.u32 %s39, 1
        %s222 = sand.u32 %s39, 1
        %s223 = smul.addr %s222, 16
        %s224 = scalar_lea.vmem [#allocation2], %s223
        // Predicated region
        $region67: #{tpu_custom_call.1} parent=65 // pred_check
          %p225 = pneg %p52
        $region68: #{tpu_custom_call.1} parent=65 // pred_check_branch
          %227 = sbr.rel (%p225) target = $region70
        $region69: #{tpu_custom_call.1} parent=65 // pred_region
          _
        $region70: #{tpu_custom_call.1} parent=65 // pred_fallthru
          _
        %s228 = sand.u32 %s39, 1
        %s229 = sand.u32 %s39, 1
        %s230 = smul.addr %s229, 16
        %s231 = scalar_lea.vmem [#allocation2], %s230
        %p232 = pneg %p52
        %p233 = pneg %p49
        %p234 = scmp.lt.s32.totalorder %s21, 3
        %s235 = scalar_select %p234, %s21, 3
        %s236 = smul.addr %s235, 8
        %s237 = scalar_lea.vmem %s1, %s236
        %p238 = pneg %p78
        %p239 = pneg %p75
        %p240 = scmp.lt.s32.totalorder %s21, 3
        %s241 = scalar_select %p240, %s21, 3
        %s242 = smul.addr %s241, 8
        %s243 = scalar_lea.vmem %s2, %s242
        %p244 = pneg %p104
        %p245 = pneg %p101
        %p246 = pneg %p132
        %p247 = pneg %p129
        %s248 = sand.u32 %s119, 1
        %s249 = scalar_lea.sflag [#allocation4], %s248
        %s250 = sand.u32 %s119, 1
        %s251 = smul.addr %s250, 16
        %s252 = scalar_lea.vmem [#allocation3], %s251
        %s253 = smul.u32 2, %s22
        %p254 = scmp.lt.s32.totalorder %s21, 3
        %s255 = scalar_select %p254, %s21, 3
        %s256 = smul.addr %s255, 8
        %s257 = scalar_lea.vmem %s1, %s256
        %p258 = scmp.lt.s32.totalorder %s21, 3
        %s259 = scalar_select %p258, %s21, 3
        %s260 = smul.addr %s259, 8
        %s261 = scalar_lea.vmem %s2, %s260
        %s262 = smul.u32 2, %s22
        %v263 = vld [vmem:[%s224] sm:$0xff]
        %v264 = vld [vmem:[%s224 + $0x8] sm:$0xff]
        %265 = vadd.xlane.f32.xlu0 %v263
        %v266 = vpop.xlane.xlu0 %265
        %v267 = vrot.slane %v266, 4
        %v268 = vadd.f32 %v266, %v267
        %v269 = vrot.slane %v268, 2
        %v270 = vadd.f32 %v268, %v269
        %v271 = vrot.slane %v270, 1
        %v272 = vadd.f32 %v270, %v271
        %273 = vadd.xlane.f32.xlu0 %v264
        %v274 = vpop.xlane.xlu0 %273
        %v275 = vrot.slane %v274, 4
        %v276 = vadd.f32 %v274, %v275
        %v277 = vrot.slane %v276, 2
        %v278 = vadd.f32 %v276, %v277
        %v279 = vrot.slane %v278, 1
        %v280 = vadd.f32 %v278, %v279
        %v281 = vmul.f32 %v263, %v263
        %v282 = vmul.f32 %v264, %v264
        %283 = vadd.xlane.f32.xlu0 %v281
        %v284 = vpop.xlane.xlu0 %283
        %v285 = vrot.slane %v284, 4
        %v286 = vadd.f32 %v284, %v285
        %v287 = vrot.slane %v286, 2
        %v288 = vadd.f32 %v286, %v287
        %v289 = vrot.slane %v288, 1
        %v290 = vadd.f32 %v288, %v289
        %291 = vadd.xlane.f32.xlu0 %v282
        %v292 = vpop.xlane.xlu0 %291
        %v293 = vrot.slane %v292, 4
        %v294 = vadd.f32 %v292, %v293
        %v295 = vrot.slane %v294, 2
        %v296 = vadd.f32 %v294, %v295
        %v297 = vrot.slane %v296, 1
        %v298 = vadd.f32 %v296, %v297
        %v299 = vmul.f32 %v272, 0.0009765625
        %v300 = vmul.f32 %v280, 0.0009765625
        %v301 = vmul.f32 %v272, %v299
        %v302 = vmul.f32 %v280, %v300
        %v303 = vsub.f32 %v290, %v301
        %v304 = vsub.f32 %v298, %v302
        %v305 = vmul.f32 %v303, 0.0009775171
        %v306 = vmul.f32 %v304, 0.0009775171
        %v307 = vmax.f32 %v305, 0.0
        %v308 = vmax.f32 %v306, 0.0
        %v309 = vadd.f32 %v307, 1e-05
        %v310 = vadd.f32 %v308, 1e-05
        %v311 = vrsqrt.pop %v309
        %v312 = vrsqrt.pop %v310
        %v313 = vld [vmem:[%s257] sm:$0xff]
        %v314 = vld [vmem:[%s261] sm:$0xff]
        %v315 = vmul.f32 %v311, %v313
        %v316 = vmul.f32 %v312, %v313
        %v317 = vxor.u32 %v263, 2147483648
        %v318 = vxor.u32 %v264, 2147483648
        %v319 = vmul.f32 %v317, 1.442695
        %v320 = vpow.pop %v319
        %v321 = vmul.f32 %v318, 1.442695
        %v322 = vpow.pop %v321
        %v323 = vadd.f32 %v320, 1.0
        %v324 = vadd.f32 %v322, 1.0
        %v325 = vrcp.pop %v323
        %v326 = vmul.f32 1.0, %v325
        %v327 = vrcp.pop %v324
        %v328 = vmul.f32 1.0, %v327
        %v329 = vmul.f32 %v263, %v326
        %v330 = vmul.f32 %v264, %v328
        %332 = vset.pattern.permute.xlu0 0
        %333 = vperm.xlu0 %332, %v315
        %v334 = vpop.permute.xlu0 %333
        %337 = vset.pattern.permute.xlu0 0
        %338 = vperm.xlu0 %337, %v316
        %v339 = vpop.permute.xlu0 %338
        %v341 = vmul.f32 %v329, %v334
        %v342 = vmul.f32 %v330, %v339
        %344 = vset.pattern.permute.xlu0 0
        %345 = vperm.xlu0 %344, %v314
        %v346 = vpop.permute.xlu0 %345
        %v348 = vadd.f32 %v341, %v346
        %v349 = vadd.f32 %v342, %v346
        %350 = vst [vmem:[%s252] sm:$0xff] %v348
        %351 = vst [vmem:[%s252 + $0x8] sm:$0xff] %v349
        %s352 = sand.u32 %s119, 1
        %s353 = scalar_lea.sflag [#allocation4], %s352
        %s354 = sand.u32 %s119, 1
        %s355 = smul.addr %s354, 16
        %s356 = scalar_lea.vmem [#allocation3], %s355
        // Predicated region
        $region71: #{tpu_custom_call.1} parent=65 // pred_check
          %p357 = pneg %p129
        $region72: #{tpu_custom_call.1} parent=65 // pred_check_branch
          %359 = sbr.rel (%p357) target = $region74
        $region73: #{tpu_custom_call.1} parent=65 // pred_region
          %s360 = smul.u32 2, %s22
          %s362 = ssub.s32 256, 256
          %363 = vsyncadd %s353, %s362
          %s364 = smul.addr %s360, 4
          %s365 = sadd.s32 %s21, %s364
          %s366 = smul.addr %s365, 128
          %s367 = scalar_lea.hbm %s3, %s366
          %s368 = sshll.u32 %s356, 4
          %s369 = int_to_ptr.vmem [resolvable:$true] %s368
          %374 = dma.vmem_to_hbm [thread:$0]  %s369, 256, %s367, %s353, 128, 512, 8
        $region74: #{tpu_custom_call.1} parent=65 // pred_fallthru
          _
      $region66: #{tpu_custom_call.1} parent=5 // pred_fallthru
        _
      %p375 = scmp.le.s32.totalorder 2, %s12
      // Predicated region
      $region75: #{tpu_custom_call.1} parent=5 // pred_check
        %p376 = pneg %p375
      $region76: #{tpu_custom_call.1} parent=5 // pred_check_branch
        %378 = sbr.rel (%p376) target = $region78
      $region77: #{tpu_custom_call.1} parent=5 // pred_region
        %s379 = ssub.s32 %s12, 2
        // Predicated region
        $region79: #{tpu_custom_call.1} parent=77 // pred_check
          %p380 = pneg %p135
        $region80: #{tpu_custom_call.1} parent=77 // pred_check_branch
          %382 = sbr.rel (%p380) target = $region82
        $region81: #{tpu_custom_call.1} parent=77 // pred_region
          %s383 = sand.u32 %s120, 1
          %s384 = scalar_lea.sflag [#allocation4], %s383
          %s385 = sand.u32 %s120, 1
          %s386 = smul.addr %s385, 16
          %s387 = scalar_lea.vmem [#allocation3], %s386
          %388 = dma.done %s384, 256
        $region82: #{tpu_custom_call.1} parent=77 // pred_fallthru
          _
      $region78: #{tpu_custom_call.1} parent=5 // pred_fallthru
        _
    $region6: #{tpu_custom_call.1} parent=1 // loop_footer
      %s16 = sadd.s32 1, %s12
    $region7: #{tpu_custom_call.1} parent=1 // loop_footer_branch
      %11 = sbr.rel target = $region3
    $region8: #{tpu_custom_call.1} parent=1 // loop_exit
      _
    %389 = vsyncpa [#allocation4], 1
    %s390 = scalar_lea.sflag [#allocation4], 1
    %391 = vsyncpa %s390, 1

</llo_original>
